<compile_context>
chip_gen: v6e
topology: v6e:2x2x1
jax: 0.10.0
libtpu: 0.0.40
codegen_flags: <defaults>
</compile_context>

<pallas_src>
import math

import jax
import jax.numpy as jnp
from jax.experimental import pallas as pl
from jax.experimental.pallas import tpu as pltpu

LANE = 128


def _round_up(a, b):
    return -(-a // b) * b


def _make_mae_kernel(S, rem, num_k):
    """Per-tile partial sums of |x - t| * mask (and of mask), lane-dense out."""
    ragged = rem != S

    def kernel(x_ref, t_ref, m_ref, osum_ref, omsk_ref):
        k = pl.program_id(1)

        # f32 accumulation irrespective of input dtype (bf16-safe).
        x = x_ref[...].astype(jnp.float32)    # (Bt, C_eff, S, 128)
        t = t_ref[...].astype(jnp.float32)    # (Bt, C_eff, S, 128)
        m = m_ref[...].astype(jnp.float32)    # (Bt, 1,     S, 128)

        masked = jnp.abs(x - t) * m           # mask broadcast over channels

        def store(vals, msk):
            # Reduce over (channels, sublanes) but KEEP the 128-lane axis so
            # the store is an unmasked lane-dense vst and no cross-lane XLU
            # reduce is needed; the wrapper finishes the tiny lane reduction.
            osum_ref[...] = jnp.sum(vals, axis=(1, 2))[None, None]
            omsk_ref[...] = jnp.sum(msk, axis=(1, 2))[None, None]

        if ragged:
            # Only the last tile along the reduction axis is ragged; interior
            # tiles skip the iota/compare/select entirely.  OOB sublanes may
            # hold arbitrary HBM data (possibly NaN), so select, don't rely on
            # mask * 0.
            @pl.when(k == num_k - 1)
            def _():
                sub = jax.lax.broadcasted_iota(jnp.int32, (1, 1, S, 1), 2)
                valid = sub < rem
                store(jnp.where(valid, masked, 0.0), jnp.where(valid, m, 0.0))

            @pl.when(k != num_k - 1)
            def _():
                store(masked, m)
        else:
            store(masked, m)

    return kernel


def mean_absolute_error(inp, target, dynamic_mask, *, max_block_bytes=12 * 1024 * 1024):
    """Pallas implementation of MeanAbsoluteError.forward. Returns shape (B,)."""
    B = inp.shape[0]
    out_dtype = inp.dtype
    itemsize = jnp.dtype(inp.dtype).itemsize
    # Sublane packing for the input dtype (f32 -> 8, bf16 -> 16, int8 -> 32).
    pack = max(8, 32 // itemsize)

    if inp.ndim >= 3:
        C = inp.shape[1]
        spatial = tuple(inp.shape[2:])
    else:
        C = 1
        spatial = tuple(inp.shape[1:])
    HW = int(math.prod(spatial)) if spatial else 1

    # Does broadcasting the mask to the input depend on the channel dim (dim 1)?
    off = inp.ndim - dynamic_mask.ndim
    ch = 1 - off
    channel_invariant = (
        inp.ndim < 3 or ch < 0 or dynamic_mask.shape[ch] == 1 or C == 1
    )

    if channel_invariant:
        # Small per-(batch, spatial) mask; reused across channels in-kernel.
        tgt_shape = (B, 1) + spatial if inp.ndim >= 3 else inp.shape
        m2d = jnp.broadcast_to(dynamic_mask, tgt_shape).reshape(B, HW).astype(inp.dtype)
        C_eff, N = C, HW
    else:
        # Mask genuinely varies along channels: it is already full-size.
        m2d = (jnp.broadcast_to(dynamic_mask, inp.shape)
               .reshape(B, C * HW).astype(inp.dtype))
        C_eff, N = 1, C * HW

    # Free metadata reshapes (row-major contiguous).
    x3 = inp.reshape(B, C_eff, N)
    t3 = target.reshape(B, C_eff, N)
    m3 = m2d.reshape(B, 1, N)

    N_pad = _round_up(N, LANE)
    if N_pad != N:
        # HBM copy taken only when N % 128 != 0; zero padding of x, t and mask
        # contributes 0 to both sums (and keeps the kernel lane-dense).
        pad = ((0, 0), (0, 0), (0, N_pad - N))
        x3, t3, m3 = jnp.pad(x3, pad), jnp.pad(t3, pad), jnp.pad(m3, pad)
    S_total = N_pad // LANE

    # Lane/sublane-dense 4-D views.
    x4 = x3.reshape(B, C_eff, S_total, LANE)
    t4 = t3.reshape(B, C_eff, S_total, LANE)
    m4 = m3.reshape(B, 1, S_total, LANE)

    # --- VMEM budget (padding-aware: the last-two block dims are (S, 128) with
    # S a multiple of `pack`, so there is no hidden sublane padding).
    # Factor 2 = double-buffered pipeline; (2*C_eff + 1) = x + t + mask rows.
    def per_sublane_bytes(bt):
        return 2 * bt * (2 * C_eff + 1) * LANE * itemsize

    # Batch tile: largest divisor of B whose minimal (pack-sublane) block fits
    # the budget (protects against huge B*C products; divisor => no ragged B).
    Bt = 1
    for d in range(B, 0, -1):
        if B % d == 0 and pack * per_sublane_bytes(d) <= max_block_bytes:
            Bt = d
            break
    num_b = B // Bt

    S_cap = max(pack, (max_block_bytes // per_sublane_bytes(Bt)) // pack * pack)
    if S_total <= S_cap:
        if num_b == 1 and S_total >= 2 * pack:
            # Split into 2 tiles so a second TensorCore (v7x megacore) has work.
            S = _round_up(-(-S_total // 2), pack)
        else:
            S = S_total
    else:
        S = S_cap
    num_k = -(-S_total // S)
    rem = S_total - (num_k - 1) * S          # valid sublanes in the last tile

    out_shape = (
        jax.ShapeDtypeStruct((num_k, num_b, Bt, LANE), jnp.float32),
        jax.ShapeDtypeStruct((num_k, num_b, Bt, LANE), jnp.float32),
    )

    sum_part, msk_part = pl.pallas_call(
        _make_mae_kernel(S, rem, num_k),
        out_shape=out_shape,
        grid_spec=pltpu.PrefetchScalarGridSpec(
            num_scalar_prefetch=0,
            grid=(num_b, num_k),
            in_specs=[
                pl.BlockSpec((Bt, C_eff, S, LANE), lambda b, k: (b, 0, k, 0)),
                pl.BlockSpec((Bt, C_eff, S, LANE), lambda b, k: (b, 0, k, 0)),
                pl.BlockSpec((Bt, 1, S, LANE), lambda b, k: (b, 0, k, 0)),
            ],
            out_specs=[
                pl.BlockSpec((1, 1, Bt, LANE), lambda b, k: (k, b, 0, 0)),
                pl.BlockSpec((1, 1, Bt, LANE), lambda b, k: (k, b, 0, 0)),
            ],
        ),
        compiler_params=pltpu.CompilerParams(
            dimension_semantics=("parallel", "parallel"),
            vmem_limit_bytes=32 * 1024 * 1024,   # safe on v5e/v6e/v7x
        ),
    )(x4, t4, m4)

    # Tiny (num_k, B, 128) f32 partials -> final per-batch reductions.
    sum_abs = jnp.sum(sum_part.reshape(num_k, B, LANE), axis=(0, 2))    # (B,)
    msk_sum = jnp.sum(msk_part.reshape(num_k, B, LANE), axis=(0, 2))    # (B,)
    # Expanded mask repeats the small mask C_eff times along channels.
    count = float(C_eff) * msk_sum
    # NOTE: an all-zero mask for a batch yields inf/NaN, matching PyTorch.
    return (sum_abs / count).astype(out_dtype)


if __name__ == "__main__":
    key = jax.random.PRNGKey(0)
    k1, k2, k3 = jax.random.split(key, 3)

    B, C, H, W = 2, 4, 16, 16
    inp = jax.random.normal(k1, (B, C, H, W), dtype=jnp.float32)
    tgt = jax.random.normal(k2, (B, C, H, W), dtype=jnp.float32)
    # dynamic_mask broadcastable to input (per-pixel mask shared over channels)
    dyn_mask = (jax.random.uniform(k3, (B, 1, H, W)) > 0.3).astype(jnp.float32)

    out = mean_absolute_error(inp, tgt, dyn_mask)
    out = jax.block_until_ready(out)

    # Reference (plain JAX) check.
    mask_e = jnp.broadcast_to(dyn_mask, inp.shape)
    masked = jnp.abs(inp - tgt) * mask_e
    ref = masked.reshape(B, -1).sum(axis=1) / mask_e.reshape(B, -1).sum(axis=1)
    assert out.shape == (B,)
    assert jnp.allclose(out, ref, rtol=1e-5, atol=1e-5), (out, ref)

    print("KERNEL_OK")
</pallas_src>

<mosaic_0001>
module attributes {stable_mosaic.version = 11 : i64} {
  func.func @kernel(%arg0: i32, %arg1: i32, %arg2: memref<2x4x2x128xf32, #tpu.memory_space<vmem>>, %arg3: memref<2x4x2x128xf32, #tpu.memory_space<vmem>>, %arg4: memref<2x1x2x128xf32, #tpu.memory_space<vmem>>, %arg5: memref<1x1x2x128xf32, #tpu.memory_space<vmem>>, %arg6: memref<1x1x2x128xf32, #tpu.memory_space<vmem>>) attributes {dimension_semantics = [#tpu.dimension_semantics<parallel>, #tpu.dimension_semantics<parallel>], iteration_bounds = array<i64: 1, 1>, scalar_prefetch = 0 : i64, scratch_operands = 0 : i64, tpu.core_type = #tpu.core_type<tc>, window_params = [{transform_indices = @transform_0, window_bounds = array<i64: 2, 4, 2, 128>}, {transform_indices = @transform_1, window_bounds = array<i64: 2, 4, 2, 128>}, {transform_indices = @transform_2, window_bounds = array<i64: 2, 1, 2, 128>}, {transform_indices = @transform_3, window_bounds = array<i64: 1, 1, 2, 128>}, {transform_indices = @transform_4, window_bounds = array<i64: 1, 1, 2, 128>}]} {
    %c0 = arith.constant 0 : index
    %c0_0 = arith.constant 0 : index
    %c0_1 = arith.constant 0 : index
    %c0_2 = arith.constant 0 : index
    %0 = vector.load %arg2[%c0, %c0_0, %c0_1, %c0_2] : memref<2x4x2x128xf32, #tpu.memory_space<vmem>>, vector<2x4x2x128xf32>
    %c0_3 = arith.constant 0 : index
    %c0_4 = arith.constant 0 : index
    %c0_5 = arith.constant 0 : index
    %c0_6 = arith.constant 0 : index
    %1 = vector.load %arg3[%c0_3, %c0_4, %c0_5, %c0_6] : memref<2x4x2x128xf32, #tpu.memory_space<vmem>>, vector<2x4x2x128xf32>
    %c0_7 = arith.constant 0 : index
    %c0_8 = arith.constant 0 : index
    %c0_9 = arith.constant 0 : index
    %c0_10 = arith.constant 0 : index
    %2 = vector.load %arg4[%c0_7, %c0_8, %c0_9, %c0_10] : memref<2x1x2x128xf32, #tpu.memory_space<vmem>>, vector<2x1x2x128xf32>
    %3 = arith.subf %0, %1 : vector<2x4x2x128xf32>
    %4 = math.absf %3 : vector<2x4x2x128xf32>
    %5 = vector.broadcast %2 : vector<2x1x2x128xf32> to vector<2x4x2x128xf32>
    %6 = arith.mulf %4, %5 : vector<2x4x2x128xf32>
    %cst = arith.constant dense<0.000000e+00> : vector<2x128xf32>
    %7 = vector.multi_reduction <add>, %6, %cst [1, 2] : vector<2x4x2x128xf32> to vector<2x128xf32>
    %8 = vector.shape_cast %7 : vector<2x128xf32> to vector<1x1x2x128xf32>
    %c0_11 = arith.constant 0 : index
    %c0_12 = arith.constant 0 : index
    %c0_13 = arith.constant 0 : index
    %c0_14 = arith.constant 0 : index
    %9 = vector.load %arg5[%c0_11, %c0_12, %c0_13, %c0_14] : memref<1x1x2x128xf32, #tpu.memory_space<vmem>>, vector<1x1x2x128xf32>
    tpu.vector_store %arg5[%c0_11, %c0_12, %c0_13, %c0_14], %8 {strides = array<i32>} : memref<1x1x2x128xf32, #tpu.memory_space<vmem>>, vector<1x1x2x128xf32>,
    %cst_15 = arith.constant dense<0.000000e+00> : vector<2x128xf32>
    %10 = vector.multi_reduction <add>, %2, %cst_15 [1, 2] : vector<2x1x2x128xf32> to vector<2x128xf32>
    %11 = vector.shape_cast %10 : vector<2x128xf32> to vector<1x1x2x128xf32>
    %c0_16 = arith.constant 0 : index
    %c0_17 = arith.constant 0 : index
    %c0_18 = arith.constant 0 : index
    %c0_19 = arith.constant 0 : index
    %12 = vector.load %arg6[%c0_16, %c0_17, %c0_18, %c0_19] : memref<1x1x2x128xf32, #tpu.memory_space<vmem>>, vector<1x1x2x128xf32>
    tpu.vector_store %arg6[%c0_16, %c0_17, %c0_18, %c0_19], %11 {strides = array<i32>} : memref<1x1x2x128xf32, #tpu.memory_space<vmem>>, vector<1x1x2x128xf32>,
    return
  }
  func.func @transform_0(%arg0: i32, %arg1: i32) -> (i32, i32, i32, i32) {
    %c0_i32 = arith.constant 0 : i32
    %c0_i32_0 = arith.constant 0 : i32
    %c0_i32_1 = arith.constant 0 : i32
    return %arg0, %c0_i32, %arg1, %c0_i32_0 : i32, i32, i32, i32
  }
  func.func @transform_1(%arg0: i32, %arg1: i32) -> (i32, i32, i32, i32) {
    %c0_i32 = arith.constant 0 : i32
    %c0_i32_0 = arith.constant 0 : i32
    %c0_i32_1 = arith.constant 0 : i32
    return %arg0, %c0_i32, %arg1, %c0_i32_0 : i32, i32, i32, i32
  }
  func.func @transform_2(%arg0: i32, %arg1: i32) -> (i32, i32, i32, i32) {
    %c0_i32 = arith.constant 0 : i32
    %c0_i32_0 = arith.constant 0 : i32
    %c0_i32_1 = arith.constant 0 : i32
    return %arg0, %c0_i32, %arg1, %c0_i32_0 : i32, i32, i32, i32
  }
  func.func @transform_3(%arg0: i32, %arg1: i32) -> (i32, i32, i32, i32) {
    %c0_i32 = arith.constant 0 : i32
    %c0_i32_0 = arith.constant 0 : i32
    %c0_i32_1 = arith.constant 0 : i32
    return %arg1, %arg0, %c0_i32, %c0_i32_0 : i32, i32, i32, i32
  }
  func.func @transform_4(%arg0: i32, %arg1: i32) -> (i32, i32, i32, i32) {
    %c0_i32 = arith.constant 0 : i32
    %c0_i32_0 = arith.constant 0 : i32
    %c0_i32_1 = arith.constant 0 : i32
    return %arg1, %arg0, %c0_i32, %c0_i32_0 : i32, i32, i32, i32
  }
}

</mosaic_0001>

<llo_original>
// kernel: tpu_custom_call.1
$region0: #{tpu_custom_call.1}
  #allocation0 [shape = 'u32[]', space=smem, size = 0x4, offset = 0x4, fixed_abs, tag = 'smem constant byte address 0x4 - core index']
  #allocation1 [shape = 'u32[144,128]{1,0:T(1,128)}', space=vmem, size = 0x12000, scoped, tag = 'internal scratch']
  %s0 = inlined_call_operand.hbm [shape: f32[2,4,2,128], index: 0, kind: input, shape index: {}]
  %s1 = inlined_call_operand.hbm [shape: f32[2,4,2,128], index: 1, kind: input, shape index: {}]
  %s2 = inlined_call_operand.hbm [shape: f32[2,1,2,128], index: 2, kind: input, shape index: {}]
  %s3 = inlined_call_operand.hbm [shape: f32[1,1,2,128], index: 3, kind: output, shape index: {0}]
  %s4 = inlined_call_operand.hbm [shape: f32[1,1,2,128], index: 4, kind: output, shape index: {1}]
  %5 = xla_tuple %s3, %s4
  %s6 = sld [smem:[#allocation0]]
  $region42: #{tpu_custom_call.1} parent=0
    _
  %s8 = ssub.s32 1, %s6
  %s9 = scalar_select 0, %s8, %s6
  $region1: #{tpu_custom_call.1} parent=0
    #allocation2 [shape = 'u8[8192]{0}', space=vmem, size = 0x2000, scoped, tag = 'input window, operand 0, single buffered']
    #allocation3 [shape = 's32[1]{0}', space=sflag, size = 0x4, scoped, tag = 'scoped memory for tpu_custom_call.1']
    #allocation4 [shape = 's32[1]{0}', space=sflag, size = 0x4, scoped, tag = 'scoped memory for tpu_custom_call.1']
    #allocation5 [shape = 'u8[8192]{0}', space=vmem, size = 0x2000, scoped, tag = 'input window, operand 1, single buffered']
    #allocation6 [shape = 's32[1]{0}', space=sflag, size = 0x4, scoped, tag = 'scoped memory for tpu_custom_call.1']
    #allocation7 [shape = 'u8[2048]{0}', space=vmem, size = 0x800, scoped, tag = 'input window, operand 2, single buffered']
    #allocation8 [shape = 'u8[1024]{0}', space=vmem, size = 0x400, scoped, tag = 'output window, operand 0, single buffered']
    #allocation9 [shape = 'u8[1024]{0}', space=vmem, size = 0x400, scoped, tag = 'output window, operand 1, single buffered']
    #allocation10 [shape = 's32[1]{0}', space=sflag, size = 0x4, scoped, tag = 'scoped memory for tpu_custom_call.1']
    %10 = vsyncpa [#allocation3], 0
    %11 = vsyncpa [#allocation6], 0
    %12 = vsyncpa [#allocation4], 0
    %13 = vsyncpa [#allocation10], 0
    // Predicated region
    $region2: #{tpu_custom_call.1} parent=1 // pred_check
      _
    $region3: #{tpu_custom_call.1} parent=1 // pred_check_branch
      %15 = sbr.rel (0) target = $region5
    $region4: #{tpu_custom_call.1} parent=1 // pred_region
      %s17 = ssub.s32 256, 256
      %18 = vsyncadd [#allocation3], %s17
      %s19 = sshll.u32 [#allocation2], 4
      %s20 = int_to_ptr.vmem [resolvable:$true] %s19
      %25 = dma.hbm_to_vmem [thread:$0]  %s0, 256, %s20, [#allocation3], 32, 32, 2
    $region5: #{tpu_custom_call.1} parent=1 // pred_fallthru
      _
    // Predicated region
    $region6: #{tpu_custom_call.1} parent=1 // pred_check
      _
    $region7: #{tpu_custom_call.1} parent=1 // pred_check_branch
      %27 = sbr.rel (0) target = $region9
    $region8: #{tpu_custom_call.1} parent=1 // pred_region
      %s29 = ssub.s32 256, 256
      %30 = vsyncadd [#allocation6], %s29
      %s31 = sshll.u32 [#allocation5], 4
      %s32 = int_to_ptr.vmem [resolvable:$true] %s31
      %37 = dma.hbm_to_vmem [thread:$0]  %s1, 256, %s32, [#allocation6], 32, 32, 2
    $region9: #{tpu_custom_call.1} parent=1 // pred_fallthru
      _
    // Predicated region
    $region10: #{tpu_custom_call.1} parent=1 // pred_check
      _
    $region11: #{tpu_custom_call.1} parent=1 // pred_check_branch
      %39 = sbr.rel (0) target = $region13
    $region12: #{tpu_custom_call.1} parent=1 // pred_region
      %s41 = ssub.s32 64, 64
      %42 = vsyncadd [#allocation6], %s41
      %s43 = sshll.u32 [#allocation7], 4
      %s44 = int_to_ptr.vmem [resolvable:$true] %s43
      %49 = dma.hbm_to_vmem [thread:$0]  %s2, 64, %s44, [#allocation6], 32, 32, 2
    $region13: #{tpu_custom_call.1} parent=1 // pred_fallthru
      _
    // Predicated region
    $region14: #{tpu_custom_call.1} parent=1 // pred_check
      _
    $region15: #{tpu_custom_call.1} parent=1 // pred_check_branch
      %51 = sbr.rel (0) target = $region17
    $region16: #{tpu_custom_call.1} parent=1 // pred_region
      %52 = dma.done [#allocation3], 256
    $region17: #{tpu_custom_call.1} parent=1 // pred_fallthru
      _
    // Predicated region
    $region18: #{tpu_custom_call.1} parent=1 // pred_check
      _
    $region19: #{tpu_custom_call.1} parent=1 // pred_check_branch
      %54 = sbr.rel (0) target = $region21
    $region20: #{tpu_custom_call.1} parent=1 // pred_region
      %55 = dma.done [#allocation6], 256
    $region21: #{tpu_custom_call.1} parent=1 // pred_fallthru
      _
    // Predicated region
    $region22: #{tpu_custom_call.1} parent=1 // pred_check
      _
    $region23: #{tpu_custom_call.1} parent=1 // pred_check_branch
      %57 = sbr.rel (0) target = $region25
    $region24: #{tpu_custom_call.1} parent=1 // pred_region
      %58 = dma.done [#allocation6], 64
    $region25: #{tpu_custom_call.1} parent=1 // pred_fallthru
      _
    %v59 = vld [vmem:[#allocation2] sm:$0x3]
    %v60 = vld [vmem:[#allocation2 + $0x2] sm:$0x3]
    %v61 = vld [vmem:[#allocation2 + $0x4] sm:$0x3]
    %v62 = vld [vmem:[#allocation2 + $0x6] sm:$0x3]
    %v63 = vld [vmem:[#allocation2 + $0x8] sm:$0x3]
    %v64 = vld [vmem:[#allocation2 + $0xa] sm:$0x3]
    %v65 = vld [vmem:[#allocation2 + $0xc] sm:$0x3]
    %v66 = vld [vmem:[#allocation2 + $0xe] sm:$0x3]
    %v67 = vld [vmem:[#allocation5] sm:$0x3]
    %v68 = vld [vmem:[#allocation5 + $0x2] sm:$0x3]
    %v69 = vld [vmem:[#allocation5 + $0x4] sm:$0x3]
    %v70 = vld [vmem:[#allocation5 + $0x6] sm:$0x3]
    %v71 = vld [vmem:[#allocation5 + $0x8] sm:$0x3]
    %v72 = vld [vmem:[#allocation5 + $0xa] sm:$0x3]
    %v73 = vld [vmem:[#allocation5 + $0xc] sm:$0x3]
    %v74 = vld [vmem:[#allocation5 + $0xe] sm:$0x3]
    %v75 = vld [vmem:[#allocation7] sm:$0x3]
    %v76 = vld [vmem:[#allocation7 + $0x2] sm:$0x3]
    %v77 = vsub.f32 %v59, %v67
    %v78 = vsub.f32 %v60, %v68
    %v79 = vsub.f32 %v61, %v69
    %v80 = vsub.f32 %v62, %v70
    %v81 = vsub.f32 %v63, %v71
    %v82 = vsub.f32 %v64, %v72
    %v83 = vsub.f32 %v65, %v73
    %v84 = vsub.f32 %v66, %v74
    %v85 = vand.u32 2147483647, %v77
    %v86 = vand.u32 2147483647, %v78
    %v87 = vand.u32 2147483647, %v79
    %v88 = vand.u32 2147483647, %v80
    %v89 = vand.u32 2147483647, %v81
    %v90 = vand.u32 2147483647, %v82
    %v91 = vand.u32 2147483647, %v83
    %v92 = vand.u32 2147483647, %v84
    %v93 = vmul.f32 %v85, %v75
    %v94 = vmul.f32 %v86, %v75
    %v95 = vmul.f32 %v87, %v75
    %v96 = vmul.f32 %v88, %v75
    %v97 = vmul.f32 %v89, %v76
    %v98 = vmul.f32 %v90, %v76
    %v99 = vmul.f32 %v91, %v76
    %v100 = vmul.f32 %v92, %v76
    %vm101 = vcmask 1041408
    %v102 = vsel %vm101, %v93, 0.0
    %v103 = vsel %vm101, %v94, 0.0
    %v104 = vadd.f32 %v102, %v103
    %v105 = vsel %vm101, %v95, 0.0
    %v106 = vadd.f32 %v104, %v105
    %v107 = vsel %vm101, %v96, 0.0
    %v108 = vadd.f32 %v106, %v107
    %v109 = vrot.slane %v108, 4
    %v110 = vadd.f32 %v108, %v109
    %v111 = vrot.slane %v110, 2
    %v112 = vadd.f32 %v110, %v111
    %v113 = vrot.slane %v112, 1
    %v114 = vadd.f32 %v112, %v113
    %v115 = vsel %vm101, %v97, 0.0
    %v116 = vsel %vm101, %v98, 0.0
    %v117 = vadd.f32 %v115, %v116
    %v118 = vsel %vm101, %v99, 0.0
    %v119 = vadd.f32 %v117, %v118
    %v120 = vsel %vm101, %v100, 0.0
    %v121 = vadd.f32 %v119, %v120
    %v122 = vrot.slane %v121, 4
    %v123 = vadd.f32 %v121, %v122
    %v124 = vrot.slane %v123, 2
    %v125 = vadd.f32 %v123, %v124
    %v126 = vrot.slane %v125, 1
    %v127 = vadd.f32 %v125, %v126
    %vm130 = vcmask 1041409
    %v131 = vsel %vm130, %v127, %v114
    %133 = vst [vmem:[#allocation8] sm:$0x3] %v131
    %v134 = vsel %vm101, %v75, 0.0
    %v135 = vrot.slane %v134, 4
    %v136 = vadd.f32 %v134, %v135
    %v137 = vrot.slane %v136, 2
    %v138 = vadd.f32 %v136, %v137
    %v139 = vrot.slane %v138, 1
    %v140 = vadd.f32 %v138, %v139
    %v141 = vsel %vm101, %v76, 0.0
    %v142 = vrot.slane %v141, 4
    %v143 = vadd.f32 %v141, %v142
    %v144 = vrot.slane %v143, 2
    %v145 = vadd.f32 %v143, %v144
    %v146 = vrot.slane %v145, 1
    %v147 = vadd.f32 %v145, %v146
    %v150 = vsel %vm130, %v147, %v140
    %152 = vst [vmem:[#allocation9] sm:$0x3] %v150
    // Predicated region
    $region26: #{tpu_custom_call.1} parent=1 // pred_check
      _
    $region27: #{tpu_custom_call.1} parent=1 // pred_check_branch
      %154 = sbr.rel (0) target = $region29
    $region28: #{tpu_custom_call.1} parent=1 // pred_region
      %s156 = ssub.s32 32, 32
      %157 = vsyncadd [#allocation4], %s156
      %s159 = sshll.u32 [#allocation8], 4
      %s160 = int_to_ptr.vmem [resolvable:$true] %s159
      %162 = dma.vmem_to_hbm [thread:$0]  %s160, 32, %s3, [#allocation4]
    $region29: #{tpu_custom_call.1} parent=1 // pred_fallthru
      _
    // Predicated region
    $region30: #{tpu_custom_call.1} parent=1 // pred_check
      _
    $region31: #{tpu_custom_call.1} parent=1 // pred_check_branch
      %164 = sbr.rel (0) target = $region33
    $region32: #{tpu_custom_call.1} parent=1 // pred_region
      %s166 = ssub.s32 32, 32
      %167 = vsyncadd [#allocation10], %s166
      %s169 = sshll.u32 [#allocation9], 4
      %s170 = int_to_ptr.vmem [resolvable:$true] %s169
      %172 = dma.vmem_to_hbm [thread:$0]  %s170, 32, %s4, [#allocation10]
    $region33: #{tpu_custom_call.1} parent=1 // pred_fallthru
      _
    // Predicated region
    $region34: #{tpu_custom_call.1} parent=1 // pred_check
      _
    $region35: #{tpu_custom_call.1} parent=1 // pred_check_branch
      %174 = sbr.rel (0) target = $region37
    $region36: #{tpu_custom_call.1} parent=1 // pred_region
      %175 = dma.done [#allocation4], 32
    $region37: #{tpu_custom_call.1} parent=1 // pred_fallthru
      _
    // Predicated region
    $region38: #{tpu_custom_call.1} parent=1 // pred_check
      _
    $region39: #{tpu_custom_call.1} parent=1 // pred_check_branch
      %177 = sbr.rel (0) target = $region41
    $region40: #{tpu_custom_call.1} parent=1 // pred_region
      %178 = dma.done [#allocation10], 32
    $region41: #{tpu_custom_call.1} parent=1 // pred_fallthru
      _
    %179 = vsyncpa [#allocation3], 1
    %180 = vsyncpa [#allocation6], 1
    %181 = vsyncpa [#allocation4], 1
    %182 = vsyncpa [#allocation10], 1

</llo_original>
